<compile_context>
chip_gen: v5e
topology: v5e:2x2
jax: 0.10.0
libtpu: 0.0.40
codegen_flags: <defaults>
</compile_context>

<pallas_src>
import jax
import jax.numpy as jnp
from jax.experimental import pallas as pl
from jax.experimental.pallas import tpu as pltpu

_BN_EPS = 1e-5


def _round_up(x, m):
    return (x + m - 1) // m * m


# ---------------------------------------------------------------------------
# Kernel: one (tile_b, C) slab of x -> one (tile_b, Np) slab of logits.
# ---------------------------------------------------------------------------
def _head_kernel(x_ref, w1_ref, b1_ref, w2_ref, b2_ref, w3_ref, b3_ref, out_ref):
    # Cast activations to bf16 in-kernel (VPU has slack here) so the wrapper never
    # has to materialize a padded/cast copy of x in HBM.
    x = x_ref[...].astype(jnp.bfloat16)

    # Layer 1: Linear(in, 512) with eval-mode BN folded in, then ReLU.
    # Dropout(p=0.4) is the identity in eval mode.
    h1 = jnp.dot(x, w1_ref[...], preferred_element_type=jnp.float32)
    h1 = jnp.maximum(h1 + b1_ref[...], 0.0)

    # Layer 2: Linear(512, 256) with eval-mode BN folded in, then ReLU.
    h2 = jnp.dot(h1.astype(jnp.bfloat16), w2_ref[...],
                 preferred_element_type=jnp.float32)
    h2 = jnp.maximum(h2 + b2_ref[...], 0.0)

    # Layer 3: Linear(256, num_classes) -- weights padded to 128 output lanes so the
    # store is unmasked / lane-dense.
    logits = jnp.dot(h2.astype(jnp.bfloat16), w3_ref[...],
                     preferred_element_type=jnp.float32)
    out_ref[...] = (logits + b3_ref[...]).astype(out_ref.dtype)


# ---------------------------------------------------------------------------
# Wrapper
# ---------------------------------------------------------------------------
def classification_head(x, folded, *, tile_b_max=512, out_dtype=jnp.float32):
    """Run the classification head (inference mode).

    Args:
      x: (B, in_channels) float input features (f32 or bf16; cast happens in-kernel).
      folded: dict produced by `fold_and_pad_params`.
      tile_b_max: upper bound on the batch tile (rows per grid step).
      out_dtype: logits dtype (use jnp.bfloat16 to halve the output HBM stream).

    Returns:
      (B, num_classes) logits in `out_dtype`.
    """
    B, C = x.shape
    w1, b1 = folded["w1"], folded["b1"]
    w2, b2 = folded["w2"], folded["b2"]
    w3, b3 = folded["w3"], folded["b3"]
    num_classes = folded["num_classes"]

    assert w1.shape[0] == C, (w1.shape, C)
    H1 = w1.shape[1]          # 512
    H2 = w2.shape[1]          # 256
    Np = w3.shape[1]          # num_classes padded to a multiple of 128

    # Batch tiling: balanced tiles, multiple of 8 sublanes, capped at tile_b_max.
    # Force >= 2 grid steps whenever possible so both v7x TensorCores get work.
    n_tiles = max(1, pl.cdiv(B, tile_b_max))
    if B >= 16:
        n_tiles = max(n_tiles, 2)
    tile_b = _round_up(pl.cdiv(B, n_tiles), 8)
    grid_b = pl.cdiv(B, tile_b)

    # Grid-invariant operands (constant index_map): single-buffered, stay VMEM-resident.
    resident = pl.Buffered(1)

    out = pl.pallas_call(
        _head_kernel,
        out_shape=jax.ShapeDtypeStruct((B, Np), out_dtype),
        grid=(grid_b,),
        in_specs=[
            pl.BlockSpec((tile_b, C), lambda i: (i, 0)),   # x tile follows the batch axis
            pl.BlockSpec((C, H1), lambda i: (0, 0), pipeline_mode=resident),
            pl.BlockSpec((1, H1), lambda i: (0, 0), pipeline_mode=resident),
            pl.BlockSpec((H1, H2), lambda i: (0, 0), pipeline_mode=resident),
            pl.BlockSpec((1, H2), lambda i: (0, 0), pipeline_mode=resident),
            pl.BlockSpec((H2, Np), lambda i: (0, 0), pipeline_mode=resident),
            pl.BlockSpec((1, Np), lambda i: (0, 0), pipeline_mode=resident),
        ],
        out_specs=pl.BlockSpec((tile_b, Np), lambda i: (i, 0)),
        compiler_params=pltpu.CompilerParams(
            dimension_semantics=("parallel",),
        ),
    )(x, w1, b1, w2, b2, w3, b3)

    return out[:, :num_classes]


# ---------------------------------------------------------------------------
# Parameters: PyTorch-equivalent init, then BN folding + output-lane padding + bf16 cast.
# ---------------------------------------------------------------------------
def init_params(key, in_channels, num_classes, dtype=jnp.float32):
    """PyTorch-equivalent params. Linear weights stored as (in, out) = W^T."""
    ks = jax.random.split(key, 14)

    def linear(kw, kb, fan_in, fan_out):
        bound = 1.0 / jnp.sqrt(fan_in)
        w = jax.random.uniform(kw, (fan_in, fan_out), dtype, -bound, bound)
        b = jax.random.uniform(kb, (fan_out,), dtype, -bound, bound)
        return w, b

    def bn_stats(kg, kb2, km, kv, n):
        # Non-trivial (non-default) BN params so the fold is actually exercised.
        gamma = 1.0 + 0.1 * jax.random.normal(kg, (n,), dtype)
        beta = 0.1 * jax.random.normal(kb2, (n,), dtype)
        mean = 0.1 * jax.random.normal(km, (n,), dtype)
        var = jnp.abs(jax.random.normal(kv, (n,), dtype)) + 0.5
        return gamma, beta, mean, var

    w1, b1 = linear(ks[0], ks[1], in_channels, 512)
    g1, be1, m1, v1 = bn_stats(ks[2], ks[3], ks[4], ks[5], 512)
    w2, b2 = linear(ks[6], ks[7], 512, 256)
    g2, be2, m2, v2 = bn_stats(ks[8], ks[9], ks[10], ks[11], 256)
    w3, b3 = linear(ks[12], ks[13], 256, num_classes)

    return dict(w1=w1, b1=b1, g1=g1, be1=be1, m1=m1, v1=v1,
                w2=w2, b2=b2, g2=g2, be2=be2, m2=m2, v2=v2,
                w3=w3, b3=b3)


def fold_and_pad_params(p, in_channels, num_classes, eps=_BN_EPS):
    """Fold eval-mode BN into the preceding Linear; pad the final N to 128; cast to bf16.

    Done once at parameter-prep time, so no per-call HBM passes are added. The input
    feature dim K is intentionally left unpadded (x is consumed at its native width).
    """
    def fold(w, b, gamma, beta, mean, var):
        scale = gamma / jnp.sqrt(var + eps)
        shift = beta - mean * scale
        return w * scale[None, :], b * scale + shift

    w1, b1 = fold(p["w1"], p["b1"], p["g1"], p["be1"], p["m1"], p["v1"])
    w2, b2 = fold(p["w2"], p["b2"], p["g2"], p["be2"], p["m2"], p["v2"])
    w3, b3 = p["w3"], p["b3"]

    Np = _round_up(num_classes, 128)
    w3 = jnp.pad(w3, ((0, 0), (0, Np - num_classes)))   # zero cols: sliced off afterwards
    b3 = jnp.pad(b3, ((0, Np - num_classes),))

    return dict(
        w1=w1.astype(jnp.bfloat16), b1=b1.reshape(1, -1).astype(jnp.float32),
        w2=w2.astype(jnp.bfloat16), b2=b2.reshape(1, -1).astype(jnp.float32),
        w3=w3.astype(jnp.bfloat16), b3=b3.reshape(1, -1).astype(jnp.float32),
        num_classes=num_classes,
    )


def reference_forward(x, p, eps=_BN_EPS):
    """Plain-JAX f32 reference (eval-mode BN with running stats, dropout = identity)."""
    def bn(z, gamma, beta, mean, var):
        return (z - mean) / jnp.sqrt(var + eps) * gamma + beta

    h1 = jnp.maximum(bn(x @ p["w1"] + p["b1"], p["g1"], p["be1"], p["m1"], p["v1"]), 0.0)
    h2 = jnp.maximum(bn(h1 @ p["w2"] + p["b2"], p["g2"], p["be2"], p["m2"], p["v2"]), 0.0)
    return h2 @ p["w3"] + p["b3"]


if __name__ == "__main__":
    key = jax.random.PRNGKey(0)
    k_x, k_p = jax.random.split(key)

    B, in_channels, num_classes = 8, 32, 10
    x = jax.random.normal(k_x, (B, in_channels), jnp.float32)

    params = init_params(k_p, in_channels, num_classes)
    folded = fold_and_pad_params(params, in_channels, num_classes)

    out = classification_head(x, folded)
    out = jax.block_until_ready(out)

    ref = reference_forward(x, params)
    assert out.shape == (B, num_classes), out.shape
    # bf16 matmul inputs with f32 accumulation -> loose-ish tolerance vs the f32 reference.
    assert jnp.allclose(out, ref, atol=5e-2, rtol=5e-2), "mismatch vs reference"

    print("KERNEL_OK")
</pallas_src>

<mosaic_0001>
module attributes {stable_mosaic.version = 11 : i64} {
  func.func @_head_kernel(%arg0: i32, %arg1: memref<8x32xf32, #tpu.memory_space<vmem>>, %arg2: memref<32x512xbf16, #tpu.memory_space<vmem>>, %arg3: memref<1x512xf32, #tpu.memory_space<vmem>>, %arg4: memref<512x256xbf16, #tpu.memory_space<vmem>>, %arg5: memref<1x256xf32, #tpu.memory_space<vmem>>, %arg6: memref<256x128xbf16, #tpu.memory_space<vmem>>, %arg7: memref<1x128xf32, #tpu.memory_space<vmem>>, %arg8: memref<8x128xf32, #tpu.memory_space<vmem>>) attributes {dimension_semantics = [#tpu.dimension_semantics<parallel>], iteration_bounds = array<i64: 1>, scalar_prefetch = 0 : i64, scratch_operands = 0 : i64, tpu.core_type = #tpu.core_type<tc>, window_params = [{transform_indices = @transform_0, window_bounds = array<i64: 8, 32>}, {pipeline_mode = #tpu.pipeline_mode<synchronous>, transform_indices = @transform_1, window_bounds = array<i64: 32, 512>}, {pipeline_mode = #tpu.pipeline_mode<synchronous>, transform_indices = @transform_2, window_bounds = array<i64: 1, 512>}, {pipeline_mode = #tpu.pipeline_mode<synchronous>, transform_indices = @transform_3, window_bounds = array<i64: 512, 256>}, {pipeline_mode = #tpu.pipeline_mode<synchronous>, transform_indices = @transform_4, window_bounds = array<i64: 1, 256>}, {pipeline_mode = #tpu.pipeline_mode<synchronous>, transform_indices = @transform_5, window_bounds = array<i64: 256, 128>}, {pipeline_mode = #tpu.pipeline_mode<synchronous>, transform_indices = @transform_6, window_bounds = array<i64: 1, 128>}, {transform_indices = @transform_7, window_bounds = array<i64: 8, 128>}]} {
    %c0 = arith.constant 0 : index
    %c0_0 = arith.constant 0 : index
    %0 = vector.load %arg1[%c0, %c0_0] : memref<8x32xf32, #tpu.memory_space<vmem>>, vector<8x32xf32>
    %1 = arith.truncf %0 : vector<8x32xf32> to vector<8x32xbf16>
    %c0_1 = arith.constant 0 : index
    %c0_2 = arith.constant 0 : index
    %2 = vector.load %arg2[%c0_1, %c0_2] : memref<32x512xbf16, #tpu.memory_space<vmem>>, vector<32x512xbf16>
    %cst = arith.constant dense<0.000000e+00> : vector<8x512xf32>
    %3 = tpu.matmul %1, %2, %cst {dimension_numbers = #tpu.dot_dimension_numbers<[1], [0], [0], [1], [0, 0, 1, 1], [], []>} : vector<8x32xbf16>, vector<32x512xbf16>, vector<8x512xf32> -> vector<8x512xf32>
    %c0_3 = arith.constant 0 : index
    %c0_4 = arith.constant 0 : index
    %4 = vector.load %arg3[%c0_3, %c0_4] : memref<1x512xf32, #tpu.memory_space<vmem>>, vector<1x512xf32>
    %5 = vector.broadcast %4 : vector<1x512xf32> to vector<8x512xf32>
    %6 = arith.addf %3, %5 : vector<8x512xf32>
    %cst_5 = arith.constant 0.000000e+00 : f32
    %7 = vector.broadcast %cst_5 : f32 to vector<8x512xf32>
    %8 = arith.maximumf %6, %7 : vector<8x512xf32>
    %9 = arith.truncf %8 : vector<8x512xf32> to vector<8x512xbf16>
    %c0_6 = arith.constant 0 : index
    %c0_7 = arith.constant 0 : index
    %10 = vector.load %arg4[%c0_6, %c0_7] : memref<512x256xbf16, #tpu.memory_space<vmem>>, vector<512x256xbf16>
    %cst_8 = arith.constant dense<0.000000e+00> : vector<8x256xf32>
    %11 = tpu.matmul %9, %10, %cst_8 {dimension_numbers = #tpu.dot_dimension_numbers<[1], [0], [0], [1], [0, 0, 1, 1], [], []>} : vector<8x512xbf16>, vector<512x256xbf16>, vector<8x256xf32> -> vector<8x256xf32>
    %c0_9 = arith.constant 0 : index
    %c0_10 = arith.constant 0 : index
    %12 = vector.load %arg5[%c0_9, %c0_10] : memref<1x256xf32, #tpu.memory_space<vmem>>, vector<1x256xf32>
    %13 = vector.broadcast %12 : vector<1x256xf32> to vector<8x256xf32>
    %14 = arith.addf %11, %13 : vector<8x256xf32>
    %cst_11 = arith.constant 0.000000e+00 : f32
    %15 = vector.broadcast %cst_11 : f32 to vector<8x256xf32>
    %16 = arith.maximumf %14, %15 : vector<8x256xf32>
    %17 = arith.truncf %16 : vector<8x256xf32> to vector<8x256xbf16>
    %c0_12 = arith.constant 0 : index
    %c0_13 = arith.constant 0 : index
    %18 = vector.load %arg6[%c0_12, %c0_13] : memref<256x128xbf16, #tpu.memory_space<vmem>>, vector<256x128xbf16>
    %cst_14 = arith.constant dense<0.000000e+00> : vector<8x128xf32>
    %19 = tpu.matmul %17, %18, %cst_14 {dimension_numbers = #tpu.dot_dimension_numbers<[1], [0], [0], [1], [0, 0, 1, 1], [], []>} : vector<8x256xbf16>, vector<256x128xbf16>, vector<8x128xf32> -> vector<8x128xf32>
    %c0_15 = arith.constant 0 : index
    %c0_16 = arith.constant 0 : index
    %20 = vector.load %arg7[%c0_15, %c0_16] : memref<1x128xf32, #tpu.memory_space<vmem>>, vector<1x128xf32>
    %21 = vector.broadcast %20 : vector<1x128xf32> to vector<8x128xf32>
    %22 = arith.addf %19, %21 : vector<8x128xf32>
    %c0_17 = arith.constant 0 : index
    %c0_18 = arith.constant 0 : index
    %23 = vector.load %arg8[%c0_17, %c0_18] : memref<8x128xf32, #tpu.memory_space<vmem>>, vector<8x128xf32>
    tpu.vector_store %arg8[%c0_17, %c0_18], %22 {strides = array<i32>} : memref<8x128xf32, #tpu.memory_space<vmem>>, vector<8x128xf32>,
    return
  }
  func.func @transform_0(%arg0: i32) -> (i32, i32) {
    %c0_i32 = arith.constant 0 : i32
    %c0_i32_0 = arith.constant 0 : i32
    return %arg0, %c0_i32 : i32, i32
  }
  func.func @transform_1(%arg0: i32) -> (i32, i32) {
    %c0_i32 = arith.constant 0 : i32
    %c0_i32_0 = arith.constant 0 : i32
    %c0_i32_1 = arith.constant 0 : i32
    return %c0_i32, %c0_i32_0 : i32, i32
  }
  func.func @transform_2(%arg0: i32) -> (i32, i32) {
    %c0_i32 = arith.constant 0 : i32
    %c0_i32_0 = arith.constant 0 : i32
    %c0_i32_1 = arith.constant 0 : i32
    return %c0_i32, %c0_i32_0 : i32, i32
  }
  func.func @transform_3(%arg0: i32) -> (i32, i32) {
    %c0_i32 = arith.constant 0 : i32
    %c0_i32_0 = arith.constant 0 : i32
    %c0_i32_1 = arith.constant 0 : i32
    return %c0_i32, %c0_i32_0 : i32, i32
  }
  func.func @transform_4(%arg0: i32) -> (i32, i32) {
    %c0_i32 = arith.constant 0 : i32
    %c0_i32_0 = arith.constant 0 : i32
    %c0_i32_1 = arith.constant 0 : i32
    return %c0_i32, %c0_i32_0 : i32, i32
  }
  func.func @transform_5(%arg0: i32) -> (i32, i32) {
    %c0_i32 = arith.constant 0 : i32
    %c0_i32_0 = arith.constant 0 : i32
    %c0_i32_1 = arith.constant 0 : i32
    return %c0_i32, %c0_i32_0 : i32, i32
  }
  func.func @transform_6(%arg0: i32) -> (i32, i32) {
    %c0_i32 = arith.constant 0 : i32
    %c0_i32_0 = arith.constant 0 : i32
    %c0_i32_1 = arith.constant 0 : i32
    return %c0_i32, %c0_i32_0 : i32, i32
  }
  func.func @transform_7(%arg0: i32) -> (i32, i32) {
    %c0_i32 = arith.constant 0 : i32
    %c0_i32_0 = arith.constant 0 : i32
    return %arg0, %c0_i32 : i32, i32
  }
}

</mosaic_0001>

<llo_original>
// kernel: tpu_custom_call.1
$region0: #{tpu_custom_call.1}
  #allocation0 [shape = 'u32[]', space=smem, size = 0x4, offset = 0x4, fixed_abs, tag = 'smem constant byte address 0x4 - core index']
  #allocation1 [shape = 'u32[72,128]{1,0:T(1,128)}', space=vmem, size = 0x9000, scoped, tag = 'internal scratch']
  %s0 = inlined_call_operand.hbm [shape: f32[8,32], index: 0, kind: input, shape index: {}]
  %s1 = inlined_call_operand.hbm [shape: bf16[32,512], index: 1, kind: input, shape index: {}]
  %s2 = inlined_call_operand.hbm [shape: f32[1,512], index: 2, kind: input, shape index: {}]
  %s3 = inlined_call_operand.hbm [shape: bf16[512,256], index: 3, kind: input, shape index: {}]
  %s4 = inlined_call_operand.vmem [shape: f32[1,256], index: 4, kind: input, shape index: {}]
  %s5 = inlined_call_operand.hbm [shape: bf16[256,128], index: 5, kind: input, shape index: {}]
  %s6 = inlined_call_operand.vmem [shape: f32[1,128], index: 6, kind: input, shape index: {}]
  %s7 = inlined_call_operand.hbm [shape: f32[8,128], index: 7, kind: output, shape index: {}]
  %s8 = sld [smem:[#allocation0]]
  $region58: #{tpu_custom_call.1} parent=0
    _
  %s10 = ssub.s32 1, %s8
  %s11 = scalar_select 0, %s10, %s8
  $region1: #{tpu_custom_call.1} parent=0
    #allocation2 [shape = 'u8[4096]{0}', space=vmem, size = 0x1000, scoped, tag = 'input window, operand 0, single buffered']
    #allocation3 [shape = 's32[1]{0}', space=sflag, size = 0x4, scoped, tag = 'scoped memory for tpu_custom_call.1']
    #allocation4 [shape = 's32[1]{0}', space=sflag, size = 0x4, scoped, tag = 'scoped memory for tpu_custom_call.1']
    #allocation5 [shape = 'u8[32768]{0}', space=vmem, size = 0x8000, scoped, tag = 'input window, operand 1, single buffered']
    #allocation6 [shape = 's32[1]{0}', space=sflag, size = 0x4, scoped, tag = 'scoped memory for tpu_custom_call.1']
    #allocation7 [shape = 'u8[2048]{0}', space=vmem, size = 0x800, scoped, tag = 'input window, operand 2, single buffered']
    #allocation8 [shape = 'u8[262144]{0}', space=vmem, size = 0x40000, scoped, tag = 'input window, operand 3, single buffered']
    #allocation9 [shape = 's32[1]{0}', space=sflag, size = 0x4, scoped, tag = 'scoped memory for tpu_custom_call.1']
    #allocation10 [shape = 'u8[65536]{0}', space=vmem, size = 0x10000, scoped, tag = 'input window, operand 5, single buffered']
    #allocation11 [shape = 'u8[4096]{0}', space=vmem, size = 0x1000, scoped, tag = 'output window, operand 0, single buffered']
    %12 = vsyncpa [#allocation3], 0
    %13 = vsyncpa [#allocation6], 0
    %14 = vsyncpa [#allocation9], 0
    %15 = vsyncpa [#allocation4], 0
    // Predicated region
    $region2: #{tpu_custom_call.1} parent=1 // pred_check
      _
    $region3: #{tpu_custom_call.1} parent=1 // pred_check_branch
      %17 = sbr.rel (0) target = $region5
    $region4: #{tpu_custom_call.1} parent=1 // pred_region
      %19 = vsyncadd [#allocation3], 0
      %s21 = sshll.u32 %s0, 4
      %s22 = int_to_ptr.hbm [resolvable:$true] %s21
      %s23 = sshll.u32 [#allocation2], 4
      %s24 = int_to_ptr.vmem [resolvable:$true] %s23
      %26 = dma.hbm_to_vmem [thread:$0]  %s22, 128, %s24, [#allocation3]
    $region5: #{tpu_custom_call.1} parent=1 // pred_fallthru
      _
    // Predicated region
    $region6: #{tpu_custom_call.1} parent=1 // pred_check
      _
    $region7: #{tpu_custom_call.1} parent=1 // pred_check_branch
      %28 = sbr.rel (0) target = $region9
    $region8: #{tpu_custom_call.1} parent=1 // pred_region
      %30 = vsyncadd [#allocation6], 0
      %s31 = sshll.u32 %s1, 4
      %s32 = int_to_ptr.hbm [resolvable:$true] %s31
      %s33 = sshll.u32 [#allocation5], 4
      %s34 = int_to_ptr.vmem [resolvable:$true] %s33
      %39 = dma.hbm_to_vmem [thread:$0]  %s32, 1024, %s34, [#allocation6], 256, 256, 16
    $region9: #{tpu_custom_call.1} parent=1 // pred_fallthru
      _
    // Predicated region
    $region10: #{tpu_custom_call.1} parent=1 // pred_check
      _
    $region11: #{tpu_custom_call.1} parent=1 // pred_check_branch
      %41 = sbr.rel (0) target = $region13
    $region12: #{tpu_custom_call.1} parent=1 // pred_region
      %43 = vsyncadd [#allocation6], 0
      %s45 = sshll.u32 %s2, 4
      %s46 = int_to_ptr.hbm [resolvable:$true] %s45
      %s47 = sshll.u32 [#allocation7], 4
      %s48 = int_to_ptr.vmem [resolvable:$true] %s47
      %50 = dma.hbm_to_vmem [thread:$0]  %s46, 64, %s48, [#allocation6]
    $region13: #{tpu_custom_call.1} parent=1 // pred_fallthru
      _
    // Predicated region
    $region14: #{tpu_custom_call.1} parent=1 // pred_check
      _
    $region15: #{tpu_custom_call.1} parent=1 // pred_check_branch
      %52 = sbr.rel (0) target = $region17
    $region16: #{tpu_custom_call.1} parent=1 // pred_region
      %54 = vsyncadd [#allocation9], 0
      %s55 = sshll.u32 %s3, 4
      %s56 = int_to_ptr.hbm [resolvable:$true] %s55
      %s57 = sshll.u32 [#allocation8], 4
      %s58 = int_to_ptr.vmem [resolvable:$true] %s57
      %63 = dma.hbm_to_vmem [thread:$0]  %s56, 8192, %s58, [#allocation9], 128, 128, 8
    $region17: #{tpu_custom_call.1} parent=1 // pred_fallthru
      _
    // Predicated region
    $region18: #{tpu_custom_call.1} parent=1 // pred_check
      _
    $region19: #{tpu_custom_call.1} parent=1 // pred_check_branch
      %65 = sbr.rel (0) target = $region21
    $region20: #{tpu_custom_call.1} parent=1 // pred_region
      _
    $region21: #{tpu_custom_call.1} parent=1 // pred_fallthru
      _
    // Predicated region
    $region22: #{tpu_custom_call.1} parent=1 // pred_check
      _
    $region23: #{tpu_custom_call.1} parent=1 // pred_check_branch
      %67 = sbr.rel (0) target = $region25
    $region24: #{tpu_custom_call.1} parent=1 // pred_region
      %69 = vsyncadd [#allocation9], 0
      %s70 = sshll.u32 %s5, 4
      %s71 = int_to_ptr.hbm [resolvable:$true] %s70
      %s72 = sshll.u32 [#allocation10], 4
      %s73 = int_to_ptr.vmem [resolvable:$true] %s72
      %78 = dma.hbm_to_vmem [thread:$0]  %s71, 2048, %s73, [#allocation9], 64, 64, 4
    $region25: #{tpu_custom_call.1} parent=1 // pred_fallthru
      _
    // Predicated region
    $region26: #{tpu_custom_call.1} parent=1 // pred_check
      _
    $region27: #{tpu_custom_call.1} parent=1 // pred_check_branch
      %80 = sbr.rel (0) target = $region29
    $region28: #{tpu_custom_call.1} parent=1 // pred_region
      _
    $region29: #{tpu_custom_call.1} parent=1 // pred_fallthru
      _
    // Predicated region
    $region30: #{tpu_custom_call.1} parent=1 // pred_check
      _
    $region31: #{tpu_custom_call.1} parent=1 // pred_check_branch
      %82 = sbr.rel (0) target = $region33
    $region32: #{tpu_custom_call.1} parent=1 // pred_region
      %84 = dma.done [#allocation3], 128
    $region33: #{tpu_custom_call.1} parent=1 // pred_fallthru
      _
    // Predicated region
    $region34: #{tpu_custom_call.1} parent=1 // pred_check
      _
    $region35: #{tpu_custom_call.1} parent=1 // pred_check_branch
      %86 = sbr.rel (0) target = $region37
    $region36: #{tpu_custom_call.1} parent=1 // pred_region
      %88 = dma.done [#allocation6], 1024
    $region37: #{tpu_custom_call.1} parent=1 // pred_fallthru
      _
    // Predicated region
    $region38: #{tpu_custom_call.1} parent=1 // pred_check
      _
    $region39: #{tpu_custom_call.1} parent=1 // pred_check_branch
      %90 = sbr.rel (0) target = $region41
    $region40: #{tpu_custom_call.1} parent=1 // pred_region
      %92 = dma.done [#allocation6], 64
    $region41: #{tpu_custom_call.1} parent=1 // pred_fallthru
      _
    // Predicated region
    $region42: #{tpu_custom_call.1} parent=1 // pred_check
      _
    $region43: #{tpu_custom_call.1} parent=1 // pred_check_branch
      %94 = sbr.rel (0) target = $region45
    $region44: #{tpu_custom_call.1} parent=1 // pred_region
      %96 = dma.done [#allocation9], 8192
    $region45: #{tpu_custom_call.1} parent=1 // pred_fallthru
      _
    // Predicated region
    $region46: #{tpu_custom_call.1} parent=1 // pred_check
      _
    $region47: #{tpu_custom_call.1} parent=1 // pred_check_branch
      %98 = sbr.rel (0) target = $region49
    $region48: #{tpu_custom_call.1} parent=1 // pred_region
      %100 = dma.done [#allocation9], 2048
    $region49: #{tpu_custom_call.1} parent=1 // pred_fallthru
      _
    %v102 = vld [vmem:[#allocation2] sm:$0xff]
    %v103 = vpack.c.bf16 %v102, %v102
    %v104 = vld [vmem:[#allocation5] sm:$0xff]
    %v105 = vld [vmem:[#allocation5 + $0x8] sm:$0xff]
    %v106 = vld [vmem:[#allocation5 + $0x10] sm:$0xff]
    %v107 = vld [vmem:[#allocation5 + $0x18] sm:$0xff]
    %v108 = vld [vmem:[#allocation5 + $0x20] sm:$0xff]
    %v109 = vld [vmem:[#allocation5 + $0x28] sm:$0xff]
    %v110 = vld [vmem:[#allocation5 + $0x30] sm:$0xff]
    %v111 = vld [vmem:[#allocation5 + $0x38] sm:$0xff]
    %v112 = vld [vmem:[#allocation7] sm:$0xf]
    %v114 = vperm.slane %v112, 0
    %v115 = vperm.slane %v112, 1
    %v116 = vperm.slane %v112, 2
    %v117 = vperm.slane %v112, 3
    %v130 = vunpack.c.l.b16 %v104
    %v131 = vunpack.c.h.b16 %v104
    %v132 = vunpack.c.l.b16 %v105
    %v133 = vunpack.c.h.b16 %v105
    %v134 = vunpack.c.l.b16 %v106
    %v135 = vunpack.c.h.b16 %v106
    %v136 = vunpack.c.l.b16 %v107
    %v137 = vunpack.c.h.b16 %v107
    %v138 = vunpack.c.l.b16 %v108
    %v139 = vunpack.c.h.b16 %v108
    %v140 = vunpack.c.l.b16 %v109
    %v141 = vunpack.c.h.b16 %v109
    %v142 = vunpack.c.l.b16 %v110
    %v143 = vunpack.c.h.b16 %v110
    %v144 = vunpack.c.l.b16 %v111
    %v145 = vunpack.c.h.b16 %v111
    %v146 = vpack.c.b16 %v134, %v130
    %v147 = vpack.c.b16 %v135, %v131
    %v148 = vpack.c.b16 %v136, %v132
    %v149 = vpack.c.b16 %v137, %v133
    %v150 = vpack.c.b16 %v142, %v138
    %v151 = vpack.c.b16 %v143, %v139
    %v152 = vpack.c.b16 %v144, %v140
    %v153 = vpack.c.b16 %v145, %v141
    %vm162 = vcmask 261120
    %v164 = vsel %vm162, %v103, 0
    %166 = vmatpush.bf16.msra.mxu0 0
    %167 = vmatpush.bf16.msra.mxu0 0
    %168 = vmatpush.bf16.msra.mxu0 0
    %169 = vmatpush.bf16.msra.mxu0 0
    %170 = vmatpush.bf16.msra.mxu0 0
    %171 = vmatpush.bf16.msra.mxu0 0
    %172 = vmatpush.bf16.msra.mxu0 %v150
    %173 = vmatpush.bf16.msra.mxu0 %v146
    %174 = vmatmul.bf16.gmra.mxu0 %v164
    %v175 = vpop.f32.mrf.mxu0
    %v176 = vadd.f32 %v114, %v175
    %v177 = vpop.f32.mrf.mxu0
    %178 = vdwg.mxu0
    %179 = vmatpush.bf16.msra.mxu0 0
    %180 = vmatpush.bf16.msra.mxu0 0
    %181 = vmatpush.bf16.msra.mxu0 0
    %182 = vmatpush.bf16.msra.mxu0 0
    %183 = vmatpush.bf16.msra.mxu0 0
    %184 = vmatpush.bf16.msra.mxu0 0
    %185 = vmatpush.bf16.msra.mxu0 %v151
    %186 = vmatpush.bf16.msra.mxu0 %v147
    %187 = vmatmul.bf16.gmra.mxu0 %v164
    %v188 = vpop.f32.mrf.mxu0
    %v189 = vadd.f32 %v115, %v188
    %v190 = vpop.f32.mrf.mxu0
    %191 = vdwg.mxu0
    %192 = vmatpush.bf16.msra.mxu0 0
    %193 = vmatpush.bf16.msra.mxu0 0
    %194 = vmatpush.bf16.msra.mxu0 0
    %195 = vmatpush.bf16.msra.mxu0 0
    %196 = vmatpush.bf16.msra.mxu0 0
    %197 = vmatpush.bf16.msra.mxu0 0
    %198 = vmatpush.bf16.msra.mxu0 %v152
    %199 = vmatpush.bf16.msra.mxu0 %v148
    %200 = vmatmul.bf16.gmra.mxu0 %v164
    %v201 = vpop.f32.mrf.mxu0
    %v202 = vadd.f32 %v116, %v201
    %v203 = vpop.f32.mrf.mxu0
    %204 = vdwg.mxu0
    %205 = vmatpush.bf16.msra.mxu0 0
    %206 = vmatpush.bf16.msra.mxu0 0
    %207 = vmatpush.bf16.msra.mxu0 0
    %208 = vmatpush.bf16.msra.mxu0 0
    %209 = vmatpush.bf16.msra.mxu0 0
    %210 = vmatpush.bf16.msra.mxu0 0
    %211 = vmatpush.bf16.msra.mxu0 %v153
    %212 = vmatpush.bf16.msra.mxu0 %v149
    %213 = vmatmul.bf16.gmra.mxu0 %v164
    %v214 = vpop.f32.mrf.mxu0
    %v215 = vadd.f32 %v117, %v214
    %v216 = vpop.f32.mrf.mxu0
    %217 = vdwg.mxu0
    %v218 = vmax.f32 %v176, 0.0
    %v219 = vmax.f32 %v189, 0.0
    %v220 = vmax.f32 %v202, 0.0
    %v221 = vmax.f32 %v215, 0.0
    %v222 = vpack.c.bf16 %v218, %v218
    %v223 = vpack.c.bf16 %v219, %v219
    %v224 = vpack.c.bf16 %v220, %v220
    %v225 = vpack.c.bf16 %v221, %v221
    %v226 = vld [vmem:[#allocation8] sm:$0xff]
    %v227 = vld [vmem:[#allocation8 + $0x8] sm:$0xff]
    %v228 = vld [vmem:[#allocation8 + $0x10] sm:$0xff]
    %v229 = vld [vmem:[#allocation8 + $0x18] sm:$0xff]
    %v230 = vld [vmem:[#allocation8 + $0x20] sm:$0xff]
    %v231 = vld [vmem:[#allocation8 + $0x28] sm:$0xff]
    %v232 = vld [vmem:[#allocation8 + $0x30] sm:$0xff]
    %v233 = vld [vmem:[#allocation8 + $0x38] sm:$0xff]
    %v234 = vld [vmem:[#allocation8 + $0x40] sm:$0xff]
    %v235 = vld [vmem:[#allocation8 + $0x48] sm:$0xff]
    %v236 = vld [vmem:[#allocation8 + $0x50] sm:$0xff]
    %v237 = vld [vmem:[#allocation8 + $0x58] sm:$0xff]
    %v238 = vld [vmem:[#allocation8 + $0x60] sm:$0xff]
    %v239 = vld [vmem:[#allocation8 + $0x68] sm:$0xff]
    %v240 = vld [vmem:[#allocation8 + $0x70] sm:$0xff]
    %v241 = vld [vmem:[#allocation8 + $0x78] sm:$0xff]
    %v242 = vld [vmem:[#allocation8 + $0x80] sm:$0xff]
    %v243 = vld [vmem:[#allocation8 + $0x88] sm:$0xff]
    %v244 = vld [vmem:[#allocation8 + $0x90] sm:$0xff]
    %v245 = vld [vmem:[#allocation8 + $0x98] sm:$0xff]
    %v246 = vld [vmem:[#allocation8 + $0xa0] sm:$0xff]
    %v247 = vld [vmem:[#allocation8 + $0xa8] sm:$0xff]
    %v248 = vld [vmem:[#allocation8 + $0xb0] sm:$0xff]
    %v249 = vld [vmem:[#allocation8 + $0xb8] sm:$0xff]
    %v250 = vld [vmem:[#allocation8 + $0xc0] sm:$0xff]
    %v251 = vld [vmem:[#allocation8 + $0xc8] sm:$0xff]
    %v252 = vld [vmem:[#allocation8 + $0xd0] sm:$0xff]
    %v253 = vld [vmem:[#allocation8 + $0xd8] sm:$0xff]
    %v254 = vld [vmem:[#allocation8 + $0xe0] sm:$0xff]
    %v255 = vld [vmem:[#allocation8 + $0xe8] sm:$0xff]
    %v256 = vld [vmem:[#allocation8 + $0xf0] sm:$0xff]
    %v257 = vld [vmem:[#allocation8 + $0xf8] sm:$0xff]
    %v258 = vld [vmem:[#allocation8 + $0x100] sm:$0xff]
    %v259 = vld [vmem:[#allocation8 + $0x108] sm:$0xff]
    %v260 = vld [vmem:[#allocation8 + $0x110] sm:$0xff]
    %v261 = vld [vmem:[#allocation8 + $0x118] sm:$0xff]
    %v262 = vld [vmem:[#allocation8 + $0x120] sm:$0xff]
    %v263 = vld [vmem:[#allocation8 + $0x128] sm:$0xff]
    %v264 = vld [vmem:[#allocation8 + $0x130] sm:$0xff]
    %v265 = vld [vmem:[#allocation8 + $0x138] sm:$0xff]
    %v266 = vld [vmem:[#allocation8 + $0x140] sm:$0xff]
    %v267 = vld [vmem:[#allocation8 + $0x148] sm:$0xff]
    %v268 = vld [vmem:[#allocation8 + $0x150] sm:$0xff]
    %v269 = vld [vmem:[#allocation8 + $0x158] sm:$0xff]
    %v270 = vld [vmem:[#allocation8 + $0x160] sm:$0xff]
    %v271 = vld [vmem:[#allocation8 + $0x168] sm:$0xff]
    %v272 = vld [vmem:[#allocation8 + $0x170] sm:$0xff]
    %v273 = vld [vmem:[#allocation8 + $0x178] sm:$0xff]
    %v274 = vld [vmem:[#allocation8 + $0x180] sm:$0xff]
    %v275 = vld [vmem:[#allocation8 + $0x188] sm:$0xff]
    %v276 = vld [vmem:[#allocation8 + $0x190] sm:$0xff]
    %v277 = vld [vmem:[#allocation8 + $0x198] sm:$0xff]
    %v278 = vld [vmem:[#allocation8 + $0x1a0] sm:$0xff]
    %v279 = vld [vmem:[#allocation8 + $0x1a8] sm:$0xff]
    %v280 = vld [vmem:[#allocation8 + $0x1b0] sm:$0xff]
    %v281 = vld [vmem:[#allocation8 + $0x1b8] sm:$0xff]
    %v282 = vld [vmem:[#allocation8 + $0x1c0] sm:$0xff]
    %v283 = vld [vmem:[#allocation8 + $0x1c8] sm:$0xff]
    %v284 = vld [vmem:[#allocation8 + $0x1d0] sm:$0xff]
    %v285 = vld [vmem:[#allocation8 + $0x1d8] sm:$0xff]
    %v286 = vld [vmem:[#allocation8 + $0x1e0] sm:$0xff]
    %v287 = vld [vmem:[#allocation8 + $0x1e8] sm:$0xff]
    %v288 = vld [vmem:[#allocation8 + $0x1f0] sm:$0xff]
    %v289 = vld [vmem:[#allocation8 + $0x1f8] sm:$0xff]
    %v290 = vld [vmem:[%s4] sm:$0x3]
    %v292 = vperm.slane %v290, 0
    %v293 = vperm.slane %v290, 1
    %v360 = vunpack.c.l.b16 %v226
    %v361 = vunpack.c.h.b16 %v226
    %v362 = vunpack.c.l.b16 %v227
    %v363 = vunpack.c.h.b16 %v227
    %v364 = vunpack.c.l.b16 %v228
    %v365 = vunpack.c.h.b16 %v228
    %v366 = vunpack.c.l.b16 %v229
    %v367 = vunpack.c.h.b16 %v229
    %v368 = vunpack.c.l.b16 %v230
    %v369 = vunpack.c.h.b16 %v230
    %v370 = vunpack.c.l.b16 %v231
    %v371 = vunpack.c.h.b16 %v231
    %v372 = vunpack.c.l.b16 %v232
    %v373 = vunpack.c.h.b16 %v232
    %v374 = vunpack.c.l.b16 %v233
    %v375 = vunpack.c.h.b16 %v233
    %v376 = vunpack.c.l.b16 %v234
    %v377 = vunpack.c.h.b16 %v234
    %v378 = vunpack.c.l.b16 %v235
    %v379 = vunpack.c.h.b16 %v235
    %v380 = vunpack.c.l.b16 %v236
    %v381 = vunpack.c.h.b16 %v236
    %v382 = vunpack.c.l.b16 %v237
    %v383 = vunpack.c.h.b16 %v237
    %v384 = vunpack.c.l.b16 %v238
    %v385 = vunpack.c.h.b16 %v238
    %v386 = vunpack.c.l.b16 %v239
    %v387 = vunpack.c.h.b16 %v239
    %v388 = vunpack.c.l.b16 %v240
    %v389 = vunpack.c.h.b16 %v240
    %v390 = vunpack.c.l.b16 %v241
    %v391 = vunpack.c.h.b16 %v241
    %v392 = vunpack.c.l.b16 %v242
    %v393 = vunpack.c.h.b16 %v242
    %v394 = vunpack.c.l.b16 %v243
    %v395 = vunpack.c.h.b16 %v243
    %v396 = vunpack.c.l.b16 %v244
    %v397 = vunpack.c.h.b16 %v244
    %v398 = vunpack.c.l.b16 %v245
    %v399 = vunpack.c.h.b16 %v245
    %v400 = vunpack.c.l.b16 %v246
    %v401 = vunpack.c.h.b16 %v246
    %v402 = vunpack.c.l.b16 %v247
    %v403 = vunpack.c.h.b16 %v247
    %v404 = vunpack.c.l.b16 %v248
    %v405 = vunpack.c.h.b16 %v248
    %v406 = vunpack.c.l.b16 %v249
    %v407 = vunpack.c.h.b16 %v249
    %v408 = vunpack.c.l.b16 %v250
    %v409 = vunpack.c.h.b16 %v250
    %v410 = vunpack.c.l.b16 %v251
    %v411 = vunpack.c.h.b16 %v251
    %v412 = vunpack.c.l.b16 %v252
    %v413 = vunpack.c.h.b16 %v252
    %v414 = vunpack.c.l.b16 %v253
    %v415 = vunpack.c.h.b16 %v253
    %v416 = vunpack.c.l.b16 %v254
    %v417 = vunpack.c.h.b16 %v254
    %v418 = vunpack.c.l.b16 %v255
    %v419 = vunpack.c.h.b16 %v255
    %v420 = vunpack.c.l.b16 %v256
    %v421 = vunpack.c.h.b16 %v256
    %v422 = vunpack.c.l.b16 %v257
    %v423 = vunpack.c.h.b16 %v257
    %v424 = vunpack.c.l.b16 %v258
    %v425 = vunpack.c.h.b16 %v258
    %v426 = vunpack.c.l.b16 %v259
    %v427 = vunpack.c.h.b16 %v259
    %v428 = vunpack.c.l.b16 %v260
    %v429 = vunpack.c.h.b16 %v260
    %v430 = vunpack.c.l.b16 %v261
    %v431 = vunpack.c.h.b16 %v261
    %v432 = vunpack.c.l.b16 %v262
    %v433 = vunpack.c.h.b16 %v262
    %v434 = vunpack.c.l.b16 %v263
    %v435 = vunpack.c.h.b16 %v263
    %v436 = vunpack.c.l.b16 %v264
    %v437 = vunpack.c.h.b16 %v264
    %v438 = vunpack.c.l.b16 %v265
    %v439 = vunpack.c.h.b16 %v265
    %v440 = vunpack.c.l.b16 %v266
    %v441 = vunpack.c.h.b16 %v266
    %v442 = vunpack.c.l.b16 %v267
    %v443 = vunpack.c.h.b16 %v267
    %v444 = vunpack.c.l.b16 %v268
    %v445 = vunpack.c.h.b16 %v268
    %v446 = vunpack.c.l.b16 %v269
    %v447 = vunpack.c.h.b16 %v269
    %v448 = vunpack.c.l.b16 %v270
    %v449 = vunpack.c.h.b16 %v270
    %v450 = vunpack.c.l.b16 %v271
    %v451 = vunpack.c.h.b16 %v271
    %v452 = vunpack.c.l.b16 %v272
    %v453 = vunpack.c.h.b16 %v272
    %v454 = vunpack.c.l.b16 %v273
    %v455 = vunpack.c.h.b16 %v273
    %v456 = vunpack.c.l.b16 %v274
    %v457 = vunpack.c.h.b16 %v274
    %v458 = vunpack.c.l.b16 %v275
    %v459 = vunpack.c.h.b16 %v275
    %v460 = vunpack.c.l.b16 %v276
    %v461 = vunpack.c.h.b16 %v276
    %v462 = vunpack.c.l.b16 %v277
    %v463 = vunpack.c.h.b16 %v277
    %v464 = vunpack.c.l.b16 %v278
    %v465 = vunpack.c.h.b16 %v278
    %v466 = vunpack.c.l.b16 %v279
    %v467 = vunpack.c.h.b16 %v279
    %v468 = vunpack.c.l.b16 %v280
    %v469 = vunpack.c.h.b16 %v280
    %v470 = vunpack.c.l.b16 %v281
    %v471 = vunpack.c.h.b16 %v281
    %v472 = vunpack.c.l.b16 %v282
    %v473 = vunpack.c.h.b16 %v282
    %v474 = vunpack.c.l.b16 %v283
    %v475 = vunpack.c.h.b16 %v283
    %v476 = vunpack.c.l.b16 %v284
    %v477 = vunpack.c.h.b16 %v284
    %v478 = vunpack.c.l.b16 %v285
    %v479 = vunpack.c.h.b16 %v285
    %v480 = vunpack.c.l.b16 %v286
    %v481 = vunpack.c.h.b16 %v286
    %v482 = vunpack.c.l.b16 %v287
    %v483 = vunpack.c.h.b16 %v287
    %v484 = vunpack.c.l.b16 %v288
    %v485 = vunpack.c.h.b16 %v288
    %v486 = vunpack.c.l.b16 %v289
    %v487 = vunpack.c.h.b16 %v289
    %v488 = vpack.c.b16 %v362, %v360
    %v489 = vpack.c.b16 %v363, %v361
    %v490 = vpack.c.b16 %v366, %v364
    %v491 = vpack.c.b16 %v367, %v365
    %v492 = vpack.c.b16 %v370, %v368
    %v493 = vpack.c.b16 %v371, %v369
    %v494 = vpack.c.b16 %v374, %v372
    %v495 = vpack.c.b16 %v375, %v373
    %v496 = vpack.c.b16 %v378, %v376
    %v497 = vpack.c.b16 %v379, %v377
    %v498 = vpack.c.b16 %v382, %v380
    %v499 = vpack.c.b16 %v383, %v381
    %v500 = vpack.c.b16 %v386, %v384
    %v501 = vpack.c.b16 %v387, %v385
    %v502 = vpack.c.b16 %v390, %v388
    %v503 = vpack.c.b16 %v391, %v389
    %v504 = vpack.c.b16 %v394, %v392
    %v505 = vpack.c.b16 %v395, %v393
    %v506 = vpack.c.b16 %v398, %v396
    %v507 = vpack.c.b16 %v399, %v397
    %v508 = vpack.c.b16 %v402, %v400
    %v509 = vpack.c.b16 %v403, %v401
    %v510 = vpack.c.b16 %v406, %v404
    %v511 = vpack.c.b16 %v407, %v405
    %v512 = vpack.c.b16 %v410, %v408
    %v513 = vpack.c.b16 %v411, %v409
    %v514 = vpack.c.b16 %v414, %v412
    %v515 = vpack.c.b16 %v415, %v413
    %v516 = vpack.c.b16 %v418, %v416
    %v517 = vpack.c.b16 %v419, %v417
    %v518 = vpack.c.b16 %v422, %v420
    %v519 = vpack.c.b16 %v423, %v421
    %v520 = vpack.c.b16 %v426, %v424
    %v521 = vpack.c.b16 %v427, %v425
    %v522 = vpack.c.b16 %v430, %v428
    %v523 = vpack.c.b16 %v431, %v429
    %v524 = vpack.c.b16 %v434, %v432
    %v525 = vpack.c.b16 %v435, %v433
    %v526 = vpack.c.b16 %v438, %v436
    %v527 = vpack.c.b16 %v439, %v437
    %v528 = vpack.c.b16 %v442, %v440
    %v529 = vpack.c.b16 %v443, %v441
    %v530 = vpack.c.b16 %v446, %v444
    %v531 = vpack.c.b16 %v447, %v445
    %v532 = vpack.c.b16 %v450, %v448
    %v533 = vpack.c.b16 %v451, %v449
    %v534 = vpack.c.b16 %v454, %v452
    %v535 = vpack.c.b16 %v455, %v453
    %v536 = vpack.c.b16 %v458, %v456
    %v537 = vpack.c.b16 %v459, %v457
    %v538 = vpack.c.b16 %v462, %v460
    %v539 = vpack.c.b16 %v463, %v461
    %v540 = vpack.c.b16 %v466, %v464
    %v541 = vpack.c.b16 %v467, %v465
    %v542 = vpack.c.b16 %v470, %v468
    %v543 = vpack.c.b16 %v471, %v469
    %v544 = vpack.c.b16 %v474, %v472
    %v545 = vpack.c.b16 %v475, %v473
    %v546 = vpack.c.b16 %v478, %v476
    %v547 = vpack.c.b16 %v479, %v477
    %v548 = vpack.c.b16 %v482, %v480
    %v549 = vpack.c.b16 %v483, %v481
    %v550 = vpack.c.b16 %v486, %v484
    %v551 = vpack.c.b16 %v487, %v485
    %616 = vmatpush.bf16.msra.mxu0 %v502
    %617 = vmatpush.bf16.msra.mxu0 %v500
    %618 = vmatpush.bf16.msra.mxu0 %v498
    %619 = vmatpush.bf16.msra.mxu0 %v496
    %620 = vmatpush.bf16.msra.mxu0 %v494
    %621 = vmatpush.bf16.msra.mxu0 %v492
    %622 = vmatpush.bf16.msra.mxu0 %v490
    %623 = vmatpush.bf16.msra.mxu0 %v488
    %624 = vmatmul.bf16.gmra.mxu0 %v222
    %v625 = vpop.f32.mrf.mxu0
    %v626 = vadd.f32 %v292, %v625
    %v627 = vpop.f32.mrf.mxu0
    %628 = vdwg.mxu0
    %629 = vmatpush.bf16.msra.mxu0 %v518
    %630 = vmatpush.bf16.msra.mxu0 %v516
    %631 = vmatpush.bf16.msra.mxu0 %v514
    %632 = vmatpush.bf16.msra.mxu0 %v512
    %633 = vmatpush.bf16.msra.mxu0 %v510
    %634 = vmatpush.bf16.msra.mxu0 %v508
    %635 = vmatpush.bf16.msra.mxu0 %v506
    %636 = vmatpush.bf16.msra.mxu0 %v504
    %637 = vmatmul.bf16.gmra.mxu0 %v223
    %v638 = vpop.f32.mrf.mxu0
    %v639 = vadd.f32 %v626, %v638
    %v640 = vpop.f32.mrf.mxu0
    %641 = vdwg.mxu0
    %642 = vmatpush.bf16.msra.mxu0 %v534
    %643 = vmatpush.bf16.msra.mxu0 %v532
    %644 = vmatpush.bf16.msra.mxu0 %v530
    %645 = vmatpush.bf16.msra.mxu0 %v528
    %646 = vmatpush.bf16.msra.mxu0 %v526
    %647 = vmatpush.bf16.msra.mxu0 %v524
    %648 = vmatpush.bf16.msra.mxu0 %v522
    %649 = vmatpush.bf16.msra.mxu0 %v520
    %650 = vmatmul.bf16.gmra.mxu0 %v224
    %v651 = vpop.f32.mrf.mxu0
    %v652 = vadd.f32 %v639, %v651
    %v653 = vpop.f32.mrf.mxu0
    %654 = vdwg.mxu0
    %655 = vmatpush.bf16.msra.mxu0 %v550
    %656 = vmatpush.bf16.msra.mxu0 %v548
    %657 = vmatpush.bf16.msra.mxu0 %v546
    %658 = vmatpush.bf16.msra.mxu0 %v544
    %659 = vmatpush.bf16.msra.mxu0 %v542
    %660 = vmatpush.bf16.msra.mxu0 %v540
    %661 = vmatpush.bf16.msra.mxu0 %v538
    %662 = vmatpush.bf16.msra.mxu0 %v536
    %663 = vmatmul.bf16.gmra.mxu0 %v225
    %v664 = vpop.f32.mrf.mxu0
    %v665 = vadd.f32 %v652, %v664
    %v666 = vpop.f32.mrf.mxu0
    %667 = vdwg.mxu0
    %668 = vmatpush.bf16.msra.mxu0 %v503
    %669 = vmatpush.bf16.msra.mxu0 %v501
    %670 = vmatpush.bf16.msra.mxu0 %v499
    %671 = vmatpush.bf16.msra.mxu0 %v497
    %672 = vmatpush.bf16.msra.mxu0 %v495
    %673 = vmatpush.bf16.msra.mxu0 %v493
    %674 = vmatpush.bf16.msra.mxu0 %v491
    %675 = vmatpush.bf16.msra.mxu0 %v489
    %676 = vmatmul.bf16.gmra.mxu0 %v222
    %v677 = vpop.f32.mrf.mxu0
    %v678 = vadd.f32 %v293, %v677
    %v679 = vpop.f32.mrf.mxu0
    %680 = vdwg.mxu0
    %681 = vmatpush.bf16.msra.mxu0 %v519
    %682 = vmatpush.bf16.msra.mxu0 %v517
    %683 = vmatpush.bf16.msra.mxu0 %v515
    %684 = vmatpush.bf16.msra.mxu0 %v513
    %685 = vmatpush.bf16.msra.mxu0 %v511
    %686 = vmatpush.bf16.msra.mxu0 %v509
    %687 = vmatpush.bf16.msra.mxu0 %v507
    %688 = vmatpush.bf16.msra.mxu0 %v505
    %689 = vmatmul.bf16.gmra.mxu0 %v223
    %v690 = vpop.f32.mrf.mxu0
    %v691 = vadd.f32 %v678, %v690
    %v692 = vpop.f32.mrf.mxu0
    %693 = vdwg.mxu0
    %694 = vmatpush.bf16.msra.mxu0 %v535
    %695 = vmatpush.bf16.msra.mxu0 %v533
    %696 = vmatpush.bf16.msra.mxu0 %v531
    %697 = vmatpush.bf16.msra.mxu0 %v529
    %698 = vmatpush.bf16.msra.mxu0 %v527
    %699 = vmatpush.bf16.msra.mxu0 %v525
    %700 = vmatpush.bf16.msra.mxu0 %v523
    %701 = vmatpush.bf16.msra.mxu0 %v521
    %702 = vmatmul.bf16.gmra.mxu0 %v224
    %v703 = vpop.f32.mrf.mxu0
    %v704 = vadd.f32 %v691, %v703
    %v705 = vpop.f32.mrf.mxu0
    %706 = vdwg.mxu0
    %707 = vmatpush.bf16.msra.mxu0 %v551
    %708 = vmatpush.bf16.msra.mxu0 %v549
    %709 = vmatpush.bf16.msra.mxu0 %v547
    %710 = vmatpush.bf16.msra.mxu0 %v545
    %711 = vmatpush.bf16.msra.mxu0 %v543
    %712 = vmatpush.bf16.msra.mxu0 %v541
    %713 = vmatpush.bf16.msra.mxu0 %v539
    %714 = vmatpush.bf16.msra.mxu0 %v537
    %715 = vmatmul.bf16.gmra.mxu0 %v225
    %v716 = vpop.f32.mrf.mxu0
    %v717 = vadd.f32 %v704, %v716
    %v718 = vpop.f32.mrf.mxu0
    %719 = vdwg.mxu0
    %v720 = vmax.f32 %v665, 0.0
    %v721 = vmax.f32 %v717, 0.0
    %v722 = vpack.c.bf16 %v720, %v720
    %v723 = vpack.c.bf16 %v721, %v721
    %v724 = vld [vmem:[#allocation10] sm:$0xf]
    %v725 = vld [vmem:[#allocation10 + $0x4] sm:$0xf]
    %v726 = vld [vmem:[#allocation10 + $0x8] sm:$0xf]
    %v727 = vld [vmem:[#allocation10 + $0xc] sm:$0xf]
    %v728 = vld [vmem:[#allocation10 + $0x10] sm:$0xf]
    %v729 = vld [vmem:[#allocation10 + $0x14] sm:$0xf]
    %v730 = vld [vmem:[#allocation10 + $0x18] sm:$0xf]
    %v731 = vld [vmem:[#allocation10 + $0x1c] sm:$0xf]
    %v732 = vld [vmem:[#allocation10 + $0x20] sm:$0xf]
    %v733 = vld [vmem:[#allocation10 + $0x24] sm:$0xf]
    %v734 = vld [vmem:[#allocation10 + $0x28] sm:$0xf]
    %v735 = vld [vmem:[#allocation10 + $0x2c] sm:$0xf]
    %v736 = vld [vmem:[#allocation10 + $0x30] sm:$0xf]
    %v737 = vld [vmem:[#allocation10 + $0x34] sm:$0xf]
    %v738 = vld [vmem:[#allocation10 + $0x38] sm:$0xf]
    %v739 = vld [vmem:[#allocation10 + $0x3c] sm:$0xf]
    %v740 = vld [vmem:[#allocation10 + $0x40] sm:$0xf]
    %v741 = vld [vmem:[#allocation10 + $0x44] sm:$0xf]
    %v742 = vld [vmem:[#allocation10 + $0x48] sm:$0xf]
    %v743 = vld [vmem:[#allocation10 + $0x4c] sm:$0xf]
    %v744 = vld [vmem:[#allocation10 + $0x50] sm:$0xf]
    %v745 = vld [vmem:[#allocation10 + $0x54] sm:$0xf]
    %v746 = vld [vmem:[#allocation10 + $0x58] sm:$0xf]
    %v747 = vld [vmem:[#allocation10 + $0x5c] sm:$0xf]
    %v748 = vld [vmem:[#allocation10 + $0x60] sm:$0xf]
    %v749 = vld [vmem:[#allocation10 + $0x64] sm:$0xf]
    %v750 = vld [vmem:[#allocation10 + $0x68] sm:$0xf]
    %v751 = vld [vmem:[#allocation10 + $0x6c] sm:$0xf]
    %v752 = vld [vmem:[#allocation10 + $0x70] sm:$0xf]
    %v753 = vld [vmem:[#allocation10 + $0x74] sm:$0xf]
    %v754 = vld [vmem:[#allocation10 + $0x78] sm:$0xf]
    %v755 = vld [vmem:[#allocation10 + $0x7c] sm:$0xf]
    %v756 = vld [vmem:[%s6] sm:$0x1]
    %v758 = vperm.slane %v756, 0
    %v792 = vunpack.c.l.b16 %v724
    %v793 = vunpack.c.l.b16 %v725
    %v794 = vunpack.c.l.b16 %v726
    %v795 = vunpack.c.l.b16 %v727
    %v796 = vunpack.c.l.b16 %v728
    %v797 = vunpack.c.l.b16 %v729
    %v798 = vunpack.c.l.b16 %v730
    %v799 = vunpack.c.l.b16 %v731
    %v800 = vunpack.c.l.b16 %v732
    %v801 = vunpack.c.l.b16 %v733
    %v802 = vunpack.c.l.b16 %v734
    %v803 = vunpack.c.l.b16 %v735
    %v804 = vunpack.c.l.b16 %v736
    %v805 = vunpack.c.l.b16 %v737
    %v806 = vunpack.c.l.b16 %v738
    %v807 = vunpack.c.l.b16 %v739
    %v808 = vunpack.c.l.b16 %v740
    %v809 = vunpack.c.l.b16 %v741
    %v810 = vunpack.c.l.b16 %v742
    %v811 = vunpack.c.l.b16 %v743
    %v812 = vunpack.c.l.b16 %v744
    %v813 = vunpack.c.l.b16 %v745
    %v814 = vunpack.c.l.b16 %v746
    %v815 = vunpack.c.l.b16 %v747
    %v816 = vunpack.c.l.b16 %v748
    %v817 = vunpack.c.l.b16 %v749
    %v818 = vunpack.c.l.b16 %v750
    %v819 = vunpack.c.l.b16 %v751
    %v820 = vunpack.c.l.b16 %v752
    %v821 = vunpack.c.l.b16 %v753
    %v822 = vunpack.c.l.b16 %v754
    %v823 = vunpack.c.l.b16 %v755
    %v824 = vpack.c.b16 %v793, %v792
    %v825 = vpack.c.b16 %v795, %v794
    %v826 = vpack.c.b16 %v797, %v796
    %v827 = vpack.c.b16 %v799, %v798
    %v828 = vpack.c.b16 %v801, %v800
    %v829 = vpack.c.b16 %v803, %v802
    %v830 = vpack.c.b16 %v805, %v804
    %v831 = vpack.c.b16 %v807, %v806
    %v832 = vpack.c.b16 %v809, %v808
    %v833 = vpack.c.b16 %v811, %v810
    %v834 = vpack.c.b16 %v813, %v812
    %v835 = vpack.c.b16 %v815, %v814
    %v836 = vpack.c.b16 %v817, %v816
    %v837 = vpack.c.b16 %v819, %v818
    %v838 = vpack.c.b16 %v821, %v820
    %v839 = vpack.c.b16 %v823, %v822
    %856 = vmatpush.bf16.msra.mxu0 %v831
    %857 = vmatpush.bf16.msra.mxu0 %v830
    %858 = vmatpush.bf16.msra.mxu0 %v829
    %859 = vmatpush.bf16.msra.mxu0 %v828
    %860 = vmatpush.bf16.msra.mxu0 %v827
    %861 = vmatpush.bf16.msra.mxu0 %v826
    %862 = vmatpush.bf16.msra.mxu0 %v825
    %863 = vmatpush.bf16.msra.mxu0 %v824
    %864 = vmatmul.bf16.gmra.mxu0 %v722
    %v865 = vpop.f32.mrf.mxu0
    %v866 = vadd.f32 %v758, %v865
    %v867 = vpop.f32.mrf.mxu0
    %868 = vdwg.mxu0
    %869 = vmatpush.bf16.msra.mxu0 %v839
    %870 = vmatpush.bf16.msra.mxu0 %v838
    %871 = vmatpush.bf16.msra.mxu0 %v837
    %872 = vmatpush.bf16.msra.mxu0 %v836
    %873 = vmatpush.bf16.msra.mxu0 %v835
    %874 = vmatpush.bf16.msra.mxu0 %v834
    %875 = vmatpush.bf16.msra.mxu0 %v833
    %876 = vmatpush.bf16.msra.mxu0 %v832
    %877 = vmatmul.bf16.gmra.mxu0 %v723
    %v878 = vpop.f32.mrf.mxu0
    %v879 = vadd.f32 %v866, %v878
    %v880 = vpop.f32.mrf.mxu0
    %881 = vdwg.mxu0
    %882 = vst [vmem:[#allocation11] sm:$0xff] %v879
    // Predicated region
    $region50: #{tpu_custom_call.1} parent=1 // pred_check
      _
    $region51: #{tpu_custom_call.1} parent=1 // pred_check_branch
      %884 = sbr.rel (0) target = $region53
    $region52: #{tpu_custom_call.1} parent=1 // pred_region
      %886 = vsyncadd [#allocation4], 0
      %s888 = sshll.u32 [#allocation11], 4
      %s889 = int_to_ptr.vmem [resolvable:$true] %s888
      %s890 = sshll.u32 %s7, 4
      %s891 = int_to_ptr.hbm [resolvable:$true] %s890
      %893 = dma.vmem_to_hbm [thread:$0]  %s889, 128, %s891, [#allocation4]
    $region53: #{tpu_custom_call.1} parent=1 // pred_fallthru
      _
    // Predicated region
    $region54: #{tpu_custom_call.1} parent=1 // pred_check
      _
    $region55: #{tpu_custom_call.1} parent=1 // pred_check_branch
      %895 = sbr.rel (0) target = $region57
    $region56: #{tpu_custom_call.1} parent=1 // pred_region
      %897 = dma.done [#allocation4], 128
    $region57: #{tpu_custom_call.1} parent=1 // pred_fallthru
      _
    %898 = vsyncpa [#allocation3], 1
    %899 = vsyncpa [#allocation6], 1
    %900 = vsyncpa [#allocation9], 1
    %901 = vsyncpa [#allocation4], 1

</llo_original>
